<compile_context>
chip_gen: v5e
topology: v5e:2x2
jax: 0.10.0
libtpu: 0.0.40
codegen_flags: <defaults>
</compile_context>

<pallas_src>
import functools

import jax
import jax.numpy as jnp
from jax.experimental import pallas as pl
from jax.experimental.pallas import tpu as pltpu


def _cdiv(a, b):
    return (a + b - 1) // b


def _round_up(a, b):
    return _cdiv(a, b) * b


def conv_block_kernel(x_ref, h_ref, w_ref, g_ref, b_ref, o_ref,
                      *, S, Q, G, eps, approx_gelu):
    """One (batch, length-tile) grid step in (channels, length) layout.

    x_ref: (1, S*C_in, T)         phase-split input block (T pooled columns)
    h_ref: (1, 1, S*C_in, q_eff)  halo: first Q-1 pooled columns of the next block
    w_ref: (S*G, Q*S*C_in)        conv weights as one im2col slab (G = roundup(C_out, 8))
    g_ref: (C_out, 1)             LayerNorm gamma
    b_ref: (C_out, 1)             LayerNorm beta
    o_ref: (1, C_out, T)          pooled output block, NCL layout (length on lanes)
    """
    T = o_ref.shape[-1]
    C_out = o_ref.shape[1]

    block = x_ref[0]                                    # (S*C_in, T)
    if Q > 1:
        halo = h_ref[0, 0]                              # (S*C_in, Q-1)
        ext = jnp.concatenate([block, halo], axis=-1)   # (S*C_in, T + Q - 1)
        pieces = [block] + [ext[:, q:q + T] for q in range(1, Q)]
        x3 = jnp.concatenate(pieces, axis=0)            # (Q*S*C_in, T)
    else:
        x3 = block

    # --- Conv1d (bias=False, padding='same'): ONE im2col matmul on the MXU --------
    acc = jnp.dot(w_ref[...], x3, preferred_element_type=jnp.float32)   # (S*G, T)

    gamma = g_ref[...]                                  # (C_out, 1) lane-broadcast
    beta = b_ref[...]
    inv_c = 1.0 / C_out

    # --- per pooling phase: LayerNorm over channels + GELU, fold the max ----------
    pooled = None
    for s in range(S):
        a = acc[s * G:s * G + C_out, :]                 # (C_out, T), lane-dense
        mean = jnp.sum(a, axis=0, keepdims=True) * inv_c
        ex2 = jnp.sum(a * a, axis=0, keepdims=True) * inv_c
        var = jnp.maximum(ex2 - mean * mean, 0.0)
        y = (a - mean) * jax.lax.rsqrt(var + eps)
        y = y * gamma + beta
        if approx_gelu:
            # tanh-approximate GELU (single EUP op) — cheaper on v5e, ~1e-3 deviation.
            y = 0.5 * y * (1.0 + jnp.tanh(0.7978845608028654 *
                                          (y + 0.044715 * y * y * y)))
        else:
            # exact erf GELU (matches nn.GELU() default, approximate='none')
            y = 0.5 * y * (1.0 + jax.lax.erf(y * 0.7071067811865476))
        # Dropout: identity in inference mode.
        # TODO(synk): training-mode dropout (pltpu.prng_seed + stateful_bernoulli mask).
        pooled = y if pooled is None else jnp.maximum(pooled, y)

    o_ref[0] = pooled.astype(o_ref.dtype)


def conv_block(x, w, gamma, beta, *, stride, eps=1e-5, approx_gelu=False):
    """Fused ConvBlock forward (eval mode).

    x: (B, C_in, L) float32 (PyTorch NCL).  Returns (B, C_out, L // stride) NCL.
    """
    B, C_in, L = map(int, x.shape)
    C_out, _, K = map(int, w.shape)
    S = int(stride)
    assert L >= S, "input length must be >= pooling stride"

    # PyTorch Conv1d padding='same' (stride=1, dilation=1): total = K-1, left = total//2.
    left = (K - 1) // 2

    L_out = L // S                       # MaxPool1d(kernel=S, stride=S), ceil_mode=False
    SC = S * C_in
    G = _round_up(C_out, 8)              # sublane-aligned per-phase channel group stride
    Q = _cdiv(S + K - 1, S)              # pooled-column shifts needed by the conv taps
    q_eff = max(Q - 1, 1)

    # ---- length-tile sizing: VMEM-budget driven (sublane/lane-padded sizes) --------
    try:
        vmem_cap = int(getattr(pltpu.get_tpu_info(), "vmem_capacity_bytes", 64 << 20))
    except Exception:                    # e.g. interpret mode / CPU tracing
        vmem_cap = 64 << 20              # conservative: v7x per-TC physical VMEM
    Rin = _round_up(SC, 8)
    per_col_bytes = 4 * (2 * Rin         # input block, double-buffered
                         + 2 * G         # output block, double-buffered
                         + (Q + 1) * Rin # im2col + halo-extended temporaries
                         + S * G         # f32 matmul result
                         + 4 * G)        # per-phase LN/GELU temporaries + slack
    budget = int(vmem_cap * 0.45)
    T = budget // max(per_col_bytes, 1)
    T = max(128, min(4096, (T // 128) * 128))           # lane-aligned, bounded
    T = min(T, _round_up(max(L_out, 1), 128))           # never larger than needed
    # keep >= ~4 grid steps so both TensorCores (v7x) / megacore stay busy
    while T > 128 and B * _cdiv(L_out, T) < 4:
        T = max(128, ((T // 2) // 128) * 128)

    n_l = _cdiv(max(L_out, 1), T)
    P_ext = (n_l + 1) * T                # phase-plane length incl. halo / tail padding

    # ---- wrapper-side layout prep: a single pass over the (C_in-wide) input --------
    # Pad for 'same' conv + pool/tile tail, then split the length axis into S
    # interleaved phase planes stacked on the channel axis:
    #   x_ph[b, s*C_in + ci, p] = x_padded[b, ci, p*S + s]
    # TODO(synk): a manual-DMA variant (pl.ANY + pltpu.make_async_copy) could fold this
    # re-layout into the kernel's input DMA and skip the extra HBM pass entirely.
    pad_r = P_ext * S - left - L
    x_pad = jnp.pad(x, ((0, 0), (0, 0), (left, pad_r)))
    x_ph = x_pad.reshape(B, C_in, P_ext, S)
    x_ph = jnp.transpose(x_ph, (0, 3, 1, 2)).reshape(B, SC, P_ext)
    # Halo side input: the first q_eff pooled columns of the *next* tile, per tile.
    halos = x_ph[:, :, T:].reshape(B, SC, n_l, T)[:, :, :, :q_eff]
    halos = jnp.transpose(halos, (0, 2, 1, 3))           # (B, n_l, SC, q_eff)

    # Conv weights as one im2col slab over (phase, shift, tap):
    #   w3[s*G + co, d*C_in + ci] = w[co, ci, d - s]  for  0 <= d - s < K
    w3 = jnp.zeros((S * G, Q * SC), jnp.float32)
    for s in range(S):
        for k in range(K):
            d = s + k
            w3 = w3.at[s * G:s * G + C_out, d * C_in:(d + 1) * C_in].set(
                w[:, :, k].astype(jnp.float32))
    g2 = gamma.reshape(C_out, 1).astype(jnp.float32)
    b2 = beta.reshape(C_out, 1).astype(jnp.float32)
    # TODO(synk): optionally cast x_ph / w3 to bf16 (f32 accumulation kept) for extra
    # memory-bound headroom on v6e/v7x at a small numerics cost.

    kernel = functools.partial(conv_block_kernel, S=S, Q=Q, G=G, eps=float(eps),
                               approx_gelu=bool(approx_gelu))

    # Generation-aware VMEM limit from lane/sublane-padded footprints.
    fixed_bytes = 4 * 128 * (2 * S * G + 4 * G + 2 * Rin)    # weights/params/halo
    needed = per_col_bytes * T + fixed_bytes + (2 << 20)
    vmem_limit = int(min(vmem_cap * 3 // 4, max(needed * 3 // 2, 32 << 20)))

    out = pl.pallas_call(
        kernel,
        out_shape=jax.ShapeDtypeStruct((B, C_out, n_l * T), x.dtype),
        grid_spec=pltpu.PrefetchScalarGridSpec(
            num_scalar_prefetch=0,
            grid=(B, n_l),
            in_specs=[
                pl.BlockSpec((1, SC, T), lambda b, t: (b, 0, t)),
                pl.BlockSpec((1, 1, SC, q_eff), lambda b, t: (b, t, 0, 0)),
                pl.BlockSpec((S * G, Q * SC), lambda b, t: (0, 0)),
                pl.BlockSpec((C_out, 1), lambda b, t: (0, 0)),
                pl.BlockSpec((C_out, 1), lambda b, t: (0, 0)),
            ],
            out_specs=pl.BlockSpec((1, C_out, T), lambda b, t: (b, 0, t)),
        ),
        compiler_params=pltpu.CompilerParams(
            dimension_semantics=("parallel", "parallel"),
            vmem_limit_bytes=vmem_limit),
    )(x_ph, halos, w3, g2, b2)

    return out[:, :, :L_out]


def ref_forward(x, w, gamma, beta, stride, eps=1e-5):
    """Pure-JAX reference mirroring the PyTorch forward (eval mode)."""
    K = w.shape[-1]
    total = K - 1
    pad = (total // 2, total - total // 2)
    y = jax.lax.conv_general_dilated(
        x, w, window_strides=(1,), padding=[pad],
        dimension_numbers=("NCH", "OIH", "NCH"))
    y = jnp.transpose(y, (0, 2, 1))
    mean = y.mean(-1, keepdims=True)
    var = ((y - mean) ** 2).mean(-1, keepdims=True)
    y = (y - mean) / jnp.sqrt(var + eps) * gamma + beta
    y = jnp.transpose(y, (0, 2, 1))
    y = 0.5 * y * (1.0 + jax.lax.erf(y / jnp.sqrt(2.0)))
    B, C, L = y.shape
    L_out = L // stride
    y = y[..., :L_out * stride].reshape(B, C, L_out, stride).max(-1)
    return y


if __name__ == "__main__":
    # Small shapes consistent with the module: Conv1d input is (B, C_in, L).
    B, C_IN, C_OUT, L, K, STRIDE = 2, 4, 32, 16, 3, 2

    key = jax.random.PRNGKey(0)
    k_x, k_w = jax.random.split(key)

    x = jax.random.normal(k_x, (B, C_IN, L), dtype=jnp.float32)
    # Deterministic parameter init (conv weight ~ N(0, 0.1^2); LayerNorm default init).
    w = 0.1 * jax.random.normal(k_w, (C_OUT, C_IN, K), dtype=jnp.float32)
    gamma = jnp.ones((C_OUT,), dtype=jnp.float32)
    beta = jnp.zeros((C_OUT,), dtype=jnp.float32)

    out = conv_block(x, w, gamma, beta, stride=STRIDE)
    out = jax.block_until_ready(out)

    ref = jax.block_until_ready(ref_forward(x, w, gamma, beta, STRIDE))
    assert out.shape == (B, C_OUT, L // STRIDE), out.shape
    max_err = float(jnp.max(jnp.abs(out - ref)))
    assert jnp.allclose(out, ref, atol=2e-4, rtol=2e-4), max_err

    print("KERNEL_OK")
</pallas_src>

<mosaic_0001>
module attributes {stable_mosaic.version = 11 : i64} {
  func.func @conv_block_kernel(%arg0: i32, %arg1: i32, %arg2: memref<1x8x128xf32, #tpu.memory_space<vmem>>, %arg3: memref<1x1x8x1xf32, #tpu.memory_space<vmem>>, %arg4: memref<64x16xf32, #tpu.memory_space<vmem>>, %arg5: memref<32x1xf32, #tpu.memory_space<vmem>>, %arg6: memref<32x1xf32, #tpu.memory_space<vmem>>, %arg7: memref<1x32x128xf32, #tpu.memory_space<vmem>>) attributes {dimension_semantics = [#tpu.dimension_semantics<parallel>, #tpu.dimension_semantics<parallel>], iteration_bounds = array<i64: 2, 1>, scalar_prefetch = 0 : i64, scratch_operands = 0 : i64, tpu.core_type = #tpu.core_type<tc>, window_params = [{transform_indices = @transform_0, window_bounds = array<i64: 1, 8, 128>}, {transform_indices = @transform_1, window_bounds = array<i64: 1, 1, 8, 1>}, {pipeline_mode = #tpu.pipeline_mode<synchronous>, transform_indices = @transform_2, window_bounds = array<i64: 64, 16>}, {pipeline_mode = #tpu.pipeline_mode<synchronous>, transform_indices = @transform_3, window_bounds = array<i64: 32, 1>}, {pipeline_mode = #tpu.pipeline_mode<synchronous>, transform_indices = @transform_4, window_bounds = array<i64: 32, 1>}, {transform_indices = @transform_5, window_bounds = array<i64: 1, 32, 128>}]} {
    %c0 = arith.constant 0 : index
    %c0_0 = arith.constant 0 : index
    %c0_1 = arith.constant 0 : index
    %0 = vector.load %arg2[%c0, %c0_0, %c0_1] : memref<1x8x128xf32, #tpu.memory_space<vmem>>, vector<1x8x128xf32>
    %1 = vector.shape_cast %0 : vector<1x8x128xf32> to vector<8x128xf32>
    %c0_2 = arith.constant 0 : index
    %c0_3 = arith.constant 0 : index
    %c0_4 = arith.constant 0 : index
    %c0_5 = arith.constant 0 : index
    %2 = vector.load %arg3[%c0_2, %c0_3, %c0_4, %c0_5] : memref<1x1x8x1xf32, #tpu.memory_space<vmem>>, vector<1x1x8x1xf32>
    %3 = vector.shape_cast %2 : vector<1x1x8x1xf32> to vector<8x1xf32>
    %4 = tpu.concatenate %1, %3 in 1 : vector<8x128xf32>, vector<8x1xf32> -> vector<8x129xf32>
    %5 = vector.extract_strided_slice %4 {offsets = [0, 1], sizes = [8, 128], strides = [1, 1]} : vector<8x129xf32> to vector<8x128xf32>
    %6 = tpu.concatenate %1, %5 in 0 : vector<8x128xf32>, vector<8x128xf32> -> vector<16x128xf32>
    %c0_6 = arith.constant 0 : index
    %c0_7 = arith.constant 0 : index
    %7 = vector.load %arg4[%c0_6, %c0_7] : memref<64x16xf32, #tpu.memory_space<vmem>>, vector<64x16xf32>
    %cst = arith.constant dense<0.000000e+00> : vector<64x128xf32>
    %8 = tpu.matmul %7, %6, %cst {dimension_numbers = #tpu.dot_dimension_numbers<[1], [0], [0], [1], [0, 0, 1, 1], [], []>} : vector<64x16xf32>, vector<16x128xf32>, vector<64x128xf32> -> vector<64x128xf32>
    %c0_8 = arith.constant 0 : index
    %c0_9 = arith.constant 0 : index
    %9 = vector.load %arg5[%c0_8, %c0_9] : memref<32x1xf32, #tpu.memory_space<vmem>>, vector<32x1xf32>
    %c0_10 = arith.constant 0 : index
    %c0_11 = arith.constant 0 : index
    %10 = vector.load %arg6[%c0_10, %c0_11] : memref<32x1xf32, #tpu.memory_space<vmem>>, vector<32x1xf32>
    %11 = vector.extract_strided_slice %8 {offsets = [0, 0], sizes = [32, 128], strides = [1, 1]} : vector<64x128xf32> to vector<32x128xf32>
    %cst_12 = arith.constant dense<0.000000e+00> : vector<128xf32>
    %12 = vector.multi_reduction <add>, %11, %cst_12 [0] : vector<32x128xf32> to vector<128xf32>
    %13 = vector.shape_cast %12 : vector<128xf32> to vector<1x128xf32>
    %cst_13 = arith.constant 3.125000e-02 : f32
    %14 = vector.broadcast %cst_13 : f32 to vector<1x128xf32>
    %15 = arith.mulf %13, %14 : vector<1x128xf32>
    %16 = arith.mulf %11, %11 : vector<32x128xf32>
    %cst_14 = arith.constant dense<0.000000e+00> : vector<128xf32>
    %17 = vector.multi_reduction <add>, %16, %cst_14 [0] : vector<32x128xf32> to vector<128xf32>
    %18 = vector.shape_cast %17 : vector<128xf32> to vector<1x128xf32>
    %cst_15 = arith.constant 3.125000e-02 : f32
    %19 = vector.broadcast %cst_15 : f32 to vector<1x128xf32>
    %20 = arith.mulf %18, %19 : vector<1x128xf32>
    %21 = arith.mulf %15, %15 : vector<1x128xf32>
    %22 = arith.subf %20, %21 : vector<1x128xf32>
    %cst_16 = arith.constant 0.000000e+00 : f32
    %23 = vector.broadcast %cst_16 : f32 to vector<1x128xf32>
    %24 = arith.maximumf %22, %23 : vector<1x128xf32>
    %25 = vector.broadcast %15 : vector<1x128xf32> to vector<32x128xf32>
    %26 = arith.subf %11, %25 : vector<32x128xf32>
    %cst_17 = arith.constant 9.99999974E-6 : f32
    %27 = vector.broadcast %cst_17 : f32 to vector<1x128xf32>
    %28 = arith.addf %24, %27 : vector<1x128xf32>
    %29 = math.rsqrt %28 : vector<1x128xf32>
    %30 = vector.broadcast %29 : vector<1x128xf32> to vector<32x128xf32>
    %31 = arith.mulf %26, %30 : vector<32x128xf32>
    %32 = vector.broadcast %9 : vector<32x1xf32> to vector<32x128xf32>
    %33 = arith.mulf %31, %32 : vector<32x128xf32>
    %34 = vector.broadcast %10 : vector<32x1xf32> to vector<32x128xf32>
    %35 = arith.addf %33, %34 : vector<32x128xf32>
    %cst_18 = arith.constant 5.000000e-01 : f32
    %36 = vector.broadcast %cst_18 : f32 to vector<32x128xf32>
    %37 = arith.mulf %36, %35 : vector<32x128xf32>
    %cst_19 = arith.constant 0.707106769 : f32
    %38 = vector.broadcast %cst_19 : f32 to vector<32x128xf32>
    %39 = arith.mulf %35, %38 : vector<32x128xf32>
    %40 = math.erf %39 : vector<32x128xf32>
    %cst_20 = arith.constant 1.000000e+00 : f32
    %41 = vector.broadcast %cst_20 : f32 to vector<32x128xf32>
    %42 = arith.addf %41, %40 : vector<32x128xf32>
    %43 = arith.mulf %37, %42 : vector<32x128xf32>
    %44 = vector.extract_strided_slice %8 {offsets = [32, 0], sizes = [32, 128], strides = [1, 1]} : vector<64x128xf32> to vector<32x128xf32>
    %cst_21 = arith.constant dense<0.000000e+00> : vector<128xf32>
    %45 = vector.multi_reduction <add>, %44, %cst_21 [0] : vector<32x128xf32> to vector<128xf32>
    %46 = vector.shape_cast %45 : vector<128xf32> to vector<1x128xf32>
    %cst_22 = arith.constant 3.125000e-02 : f32
    %47 = vector.broadcast %cst_22 : f32 to vector<1x128xf32>
    %48 = arith.mulf %46, %47 : vector<1x128xf32>
    %49 = arith.mulf %44, %44 : vector<32x128xf32>
    %cst_23 = arith.constant dense<0.000000e+00> : vector<128xf32>
    %50 = vector.multi_reduction <add>, %49, %cst_23 [0] : vector<32x128xf32> to vector<128xf32>
    %51 = vector.shape_cast %50 : vector<128xf32> to vector<1x128xf32>
    %cst_24 = arith.constant 3.125000e-02 : f32
    %52 = vector.broadcast %cst_24 : f32 to vector<1x128xf32>
    %53 = arith.mulf %51, %52 : vector<1x128xf32>
    %54 = arith.mulf %48, %48 : vector<1x128xf32>
    %55 = arith.subf %53, %54 : vector<1x128xf32>
    %cst_25 = arith.constant 0.000000e+00 : f32
    %56 = vector.broadcast %cst_25 : f32 to vector<1x128xf32>
    %57 = arith.maximumf %55, %56 : vector<1x128xf32>
    %58 = vector.broadcast %48 : vector<1x128xf32> to vector<32x128xf32>
    %59 = arith.subf %44, %58 : vector<32x128xf32>
    %cst_26 = arith.constant 9.99999974E-6 : f32
    %60 = vector.broadcast %cst_26 : f32 to vector<1x128xf32>
    %61 = arith.addf %57, %60 : vector<1x128xf32>
    %62 = math.rsqrt %61 : vector<1x128xf32>
    %63 = vector.broadcast %62 : vector<1x128xf32> to vector<32x128xf32>
    %64 = arith.mulf %59, %63 : vector<32x128xf32>
    %65 = vector.broadcast %9 : vector<32x1xf32> to vector<32x128xf32>
    %66 = arith.mulf %64, %65 : vector<32x128xf32>
    %67 = vector.broadcast %10 : vector<32x1xf32> to vector<32x128xf32>
    %68 = arith.addf %66, %67 : vector<32x128xf32>
    %cst_27 = arith.constant 5.000000e-01 : f32
    %69 = vector.broadcast %cst_27 : f32 to vector<32x128xf32>
    %70 = arith.mulf %69, %68 : vector<32x128xf32>
    %cst_28 = arith.constant 0.707106769 : f32
    %71 = vector.broadcast %cst_28 : f32 to vector<32x128xf32>
    %72 = arith.mulf %68, %71 : vector<32x128xf32>
    %73 = math.erf %72 : vector<32x128xf32>
    %cst_29 = arith.constant 1.000000e+00 : f32
    %74 = vector.broadcast %cst_29 : f32 to vector<32x128xf32>
    %75 = arith.addf %74, %73 : vector<32x128xf32>
    %76 = arith.mulf %70, %75 : vector<32x128xf32>
    %77 = arith.maximumf %43, %76 : vector<32x128xf32>
    %c0_30 = arith.constant 0 : index
    %c0_31 = arith.constant 0 : index
    %c0_32 = arith.constant 0 : index
    %78 = vector.load %arg7[%c0_30, %c0_31, %c0_32] : memref<1x32x128xf32, #tpu.memory_space<vmem>>, vector<1x32x128xf32>
    %79 = vector.shape_cast %78 : vector<1x32x128xf32> to vector<32x128xf32>
    %80 = vector.shape_cast %77 : vector<32x128xf32> to vector<1x32x128xf32>
    tpu.vector_store %arg7[%c0_30, %c0_31, %c0_32], %80 {strides = array<i32>} : memref<1x32x128xf32, #tpu.memory_space<vmem>>, vector<1x32x128xf32>,
    return
  }
  func.func @transform_0(%arg0: i32, %arg1: i32) -> (i32, i32, i32) {
    %c0_i32 = arith.constant 0 : i32
    %c0_i32_0 = arith.constant 0 : i32
    return %arg0, %c0_i32, %arg1 : i32, i32, i32
  }
  func.func @transform_1(%arg0: i32, %arg1: i32) -> (i32, i32, i32, i32) {
    %c0_i32 = arith.constant 0 : i32
    %c0_i32_0 = arith.constant 0 : i32
    %c0_i32_1 = arith.constant 0 : i32
    return %arg0, %arg1, %c0_i32, %c0_i32_0 : i32, i32, i32, i32
  }
  func.func @transform_2(%arg0: i32, %arg1: i32) -> (i32, i32) {
    %c0_i32 = arith.constant 0 : i32
    %c0_i32_0 = arith.constant 0 : i32
    %c0_i32_1 = arith.constant 0 : i32
    return %c0_i32, %c0_i32_0 : i32, i32
  }
  func.func @transform_3(%arg0: i32, %arg1: i32) -> (i32, i32) {
    %c0_i32 = arith.constant 0 : i32
    %c0_i32_0 = arith.constant 0 : i32
    %c0_i32_1 = arith.constant 0 : i32
    return %c0_i32, %c0_i32_0 : i32, i32
  }
  func.func @transform_4(%arg0: i32, %arg1: i32) -> (i32, i32) {
    %c0_i32 = arith.constant 0 : i32
    %c0_i32_0 = arith.constant 0 : i32
    %c0_i32_1 = arith.constant 0 : i32
    return %c0_i32, %c0_i32_0 : i32, i32
  }
  func.func @transform_5(%arg0: i32, %arg1: i32) -> (i32, i32, i32) {
    %c0_i32 = arith.constant 0 : i32
    %c0_i32_0 = arith.constant 0 : i32
    return %arg0, %c0_i32, %arg1 : i32, i32, i32
  }
}

</mosaic_0001>

<llo_original>
// kernel: tpu_custom_call.1
$region0: #{tpu_custom_call.1}
  #allocation0 [shape = 'u32[]', space=smem, size = 0x4, offset = 0x4, fixed_abs, tag = 'smem constant byte address 0x4 - core index']
  #allocation1 [shape = 'u32[72,128]{1,0:T(1,128)}', space=vmem, size = 0x9000, scoped, tag = 'internal scratch']
  %s0 = inlined_call_operand.vmem [shape: f32[2,8,256], index: 0, kind: input, shape index: {}]
  %s1 = inlined_call_operand.vmem [shape: f32[2,1,8,1], index: 1, kind: input, shape index: {}]
  %s2 = inlined_call_operand.vmem [shape: f32[64,16], index: 2, kind: input, shape index: {}]
  %s3 = inlined_call_operand.vmem [shape: f32[32,1], index: 3, kind: input, shape index: {}]
  %s4 = inlined_call_operand.vmem [shape: f32[32,1], index: 4, kind: input, shape index: {}]
  %s5 = inlined_call_operand.hbm [shape: f32[2,32,128], index: 5, kind: output, shape index: {}]
  %s6 = sld [smem:[#allocation0]]
  $region53: #{tpu_custom_call.1} parent=0
    _
  %s8 = ssub.s32 1, %s6
  %s9 = scalar_select 0, %s8, %s6
  $region1: #{tpu_custom_call.1} parent=0
    #allocation2 [shape = 'u8[32768]{0}', space=vmem, size = 0x8000, scoped, tag = 'output window, operand 0']
    #allocation3 [shape = 's32[2]{0}', space=sflag, size = 0x8, scoped, tag = 'scoped memory for tpu_custom_call.1']
    %10 = vsyncpa [#allocation3], 0
    %s11 = scalar_lea.sflag [#allocation3], 1
    %12 = vsyncpa %s11, 0
    loop: start=0, step=1, limit=4
    $region2: #{tpu_custom_call.1} parent=1 // loop_pre_header
      _
    $region3: #{tpu_custom_call.1} parent=1 // loop_header
      %s14 = sphi 0, %s18
      %p15 = scmp.ge.s32.totalorder %s14, 4
      %s21 = sphi 0, %s33
      %s22 = sphi 0, %s29
      %s23 = sphi 0, %s21
      %s24 = sphi 0, %s22
      %s25 = sphi 0, %s23
      %s26 = sphi 0, %s24
      %s38 = sphi 0, %s40
      %s41 = sphi 0, %s38
      %s42 = sphi 0, %s41
      %s58 = sphi 0, %s42
      %s66 = sphi 0, %s68
      %s69 = sphi 0, %s66
      %s70 = sphi 0, %s69
      %s86 = sphi 0, %s70
      %s90 = sphi 0, %s90
      %s92 = sphi 0, %s90
      %s93 = sphi 0, %s92
      %s107 = sphi 0, %s93
      %s111 = sphi 0, %s111
      %s113 = sphi 0, %s111
      %s114 = sphi 0, %s113
      %s128 = sphi 0, %s114
      %s132 = sphi 0, %s132
      %s134 = sphi 0, %s132
      %s135 = sphi 0, %s134
      %s149 = sphi 0, %s135
      %s157 = sphi 0, %s159
      %s160 = sphi 0, %s157
      %s161 = sphi 0, %s160
      %s177 = sphi 0, %s161
    $region4: #{tpu_custom_call.1} parent=1 // loop_header_branch
      %17 = sbr.rel (%p15) target = $region8
    $region5: #{tpu_custom_call.1} parent=1 // loop_body
      %s19 = ssub.s32 %s14, 1
      %s20 = ssub.s32 %s14, 2
      %s27 = sadd.s32 1, %s22
      %p28 = scmp.ge.s32.totalorder %s27, 1
      %s29 = scalar_select %p28, 0, %s27
      %s30 = sadd.s32 1, %s21
      %s31 = scalar_select %p28, %s30, %s21
      %p32 = scmp.ge.s32.totalorder %s31, 2
      %s33 = scalar_select %p32, 0, %s31
      %s34 = ssub.s32 %s21, %s33
      %s35 = ssub.s32 %s22, %s29
      %s36 = sor.u32 %s34, %s35
      %p37 = scmp.eq.s32.totalorder %s36, 0
      %s39 = sadd.s32 %s38, 1
      %s40 = scalar_select %p37, %s38, %s39
      %p43 = pneg %p37
      %p44 = scmp.eq.s32.totalorder %s14, 1
      %p45 = por %p43, %p44
      %p46 = scmp.ne.s32.totalorder %s38, %s41
      %p47 = scmp.eq.s32.totalorder %s14, 0
      %p48 = por %p46, %p47
      %p49 = scmp.ne.s32.totalorder %s38, %s41
      %p50 = scmp.eq.s32.totalorder %s19, 1
      %p51 = por %p49, %p50
      %p52 = scmp.ne.s32.totalorder %s41, %s42
      %p53 = scmp.eq.s32.totalorder %s19, 0
      %p54 = por %p52, %p53
      %p55 = scmp.ne.s32.totalorder %s41, %s42
      %p56 = scmp.eq.s32.totalorder %s20, 1
      %p57 = por %p55, %p56
      %p59 = scmp.ne.s32.totalorder %s42, %s58
      %p60 = scmp.eq.s32.totalorder %s20, 0
      %p61 = por %p59, %p60
      %s62 = ssub.s32 %s21, %s33
      %s63 = ssub.s32 %s22, %s29
      %s64 = sor.u32 %s62, %s63
      %p65 = scmp.eq.s32.totalorder %s64, 0
      %s67 = sadd.s32 %s66, 1
      %s68 = scalar_select %p65, %s66, %s67
      %p71 = pneg %p65
      %p72 = scmp.eq.s32.totalorder %s14, 1
      %p73 = por %p71, %p72
      %p74 = scmp.ne.s32.totalorder %s66, %s69
      %p75 = scmp.eq.s32.totalorder %s14, 0
      %p76 = por %p74, %p75
      %p77 = scmp.ne.s32.totalorder %s66, %s69
      %p78 = scmp.eq.s32.totalorder %s19, 1
      %p79 = por %p77, %p78
      %p80 = scmp.ne.s32.totalorder %s69, %s70
      %p81 = scmp.eq.s32.totalorder %s19, 0
      %p82 = por %p80, %p81
      %p83 = scmp.ne.s32.totalorder %s69, %s70
      %p84 = scmp.eq.s32.totalorder %s20, 1
      %p85 = por %p83, %p84
      %p87 = scmp.ne.s32.totalorder %s70, %s86
      %p88 = scmp.eq.s32.totalorder %s20, 0
      %p89 = por %p87, %p88
      %s91 = sadd.s32 %s90, 1
      %p94 = scmp.eq.s32.totalorder %s14, 1
      %p95 = scmp.ne.s32.totalorder %s90, %s92
      %p96 = scmp.eq.s32.totalorder %s14, 0
      %p97 = por %p95, %p96
      %p98 = scmp.ne.s32.totalorder %s90, %s92
      %p99 = scmp.eq.s32.totalorder %s19, 1
      %p100 = por %p98, %p99
      %p101 = scmp.ne.s32.totalorder %s92, %s93
      %p102 = scmp.eq.s32.totalorder %s19, 0
      %p103 = por %p101, %p102
      %p104 = scmp.ne.s32.totalorder %s92, %s93
      %p105 = scmp.eq.s32.totalorder %s20, 1
      %p106 = por %p104, %p105
      %p108 = scmp.ne.s32.totalorder %s93, %s107
      %p109 = scmp.eq.s32.totalorder %s20, 0
      %p110 = por %p108, %p109
      %s112 = sadd.s32 %s111, 1
      %p115 = scmp.eq.s32.totalorder %s14, 1
      %p116 = scmp.ne.s32.totalorder %s111, %s113
      %p117 = scmp.eq.s32.totalorder %s14, 0
      %p118 = por %p116, %p117
      %p119 = scmp.ne.s32.totalorder %s111, %s113
      %p120 = scmp.eq.s32.totalorder %s19, 1
      %p121 = por %p119, %p120
      %p122 = scmp.ne.s32.totalorder %s113, %s114
      %p123 = scmp.eq.s32.totalorder %s19, 0
      %p124 = por %p122, %p123
      %p125 = scmp.ne.s32.totalorder %s113, %s114
      %p126 = scmp.eq.s32.totalorder %s20, 1
      %p127 = por %p125, %p126
      %p129 = scmp.ne.s32.totalorder %s114, %s128
      %p130 = scmp.eq.s32.totalorder %s20, 0
      %p131 = por %p129, %p130
      %s133 = sadd.s32 %s132, 1
      %p136 = scmp.eq.s32.totalorder %s14, 1
      %p137 = scmp.ne.s32.totalorder %s132, %s134
      %p138 = scmp.eq.s32.totalorder %s14, 0
      %p139 = por %p137, %p138
      %p140 = scmp.ne.s32.totalorder %s132, %s134
      %p141 = scmp.eq.s32.totalorder %s19, 1
      %p142 = por %p140, %p141
      %p143 = scmp.ne.s32.totalorder %s134, %s135
      %p144 = scmp.eq.s32.totalorder %s19, 0
      %p145 = por %p143, %p144
      %p146 = scmp.ne.s32.totalorder %s134, %s135
      %p147 = scmp.eq.s32.totalorder %s20, 1
      %p148 = por %p146, %p147
      %p150 = scmp.ne.s32.totalorder %s135, %s149
      %p151 = scmp.eq.s32.totalorder %s20, 0
      %p152 = por %p150, %p151
      %s153 = ssub.s32 %s21, %s33
      %s154 = ssub.s32 %s22, %s29
      %s155 = sor.u32 %s153, %s154
      %p156 = scmp.eq.s32.totalorder %s155, 0
      %s158 = sadd.s32 %s157, 1
      %s159 = scalar_select %p156, %s157, %s158
      %p162 = pneg %p156
      %p163 = scmp.eq.s32.totalorder %s14, 1
      %p164 = por %p162, %p163
      %p165 = scmp.ne.s32.totalorder %s157, %s160
      %p166 = scmp.eq.s32.totalorder %s14, 0
      %p167 = por %p165, %p166
      %p168 = scmp.ne.s32.totalorder %s157, %s160
      %p169 = scmp.eq.s32.totalorder %s19, 1
      %p170 = por %p168, %p169
      %p171 = scmp.ne.s32.totalorder %s160, %s161
      %p172 = scmp.eq.s32.totalorder %s19, 0
      %p173 = por %p171, %p172
      %p174 = scmp.ne.s32.totalorder %s160, %s161
      %p175 = scmp.eq.s32.totalorder %s20, 1
      %p176 = por %p174, %p175
      %p178 = scmp.ne.s32.totalorder %s161, %s177
      %p179 = scmp.eq.s32.totalorder %s20, 0
      %p180 = por %p178, %p179
      %p181 = scmp.le.s32.totalorder 1, %s14
      %p182 = scmp.lt.s32.totalorder %s14, 3
      %p183 = pnand %p181, %p182
      %p184 = pneg %p183
      // Predicated region
      $region9: #{tpu_custom_call.1} parent=5 // pred_check
        _
      $region10: #{tpu_custom_call.1} parent=5 // pred_check_branch
        %186 = sbr.rel (%p183) target = $region12
      $region11: #{tpu_custom_call.1} parent=5 // pred_region
        %s187 = ssub.s32 %s14, 1
        // Predicated region
        $region13: #{tpu_custom_call.1} parent=11 // pred_check
          %p188 = pneg %p103
        $region14: #{tpu_custom_call.1} parent=11 // pred_check_branch
          %190 = sbr.rel (%p188) target = $region16
        $region15: #{tpu_custom_call.1} parent=11 // pred_region
          _
        $region16: #{tpu_custom_call.1} parent=11 // pred_fallthru
          _
        // Predicated region
        $region17: #{tpu_custom_call.1} parent=11 // pred_check
          %p191 = pneg %p124
        $region18: #{tpu_custom_call.1} parent=11 // pred_check_branch
          %193 = sbr.rel (%p191) target = $region20
        $region19: #{tpu_custom_call.1} parent=11 // pred_region
          _
        $region20: #{tpu_custom_call.1} parent=11 // pred_fallthru
          _
        // Predicated region
        $region21: #{tpu_custom_call.1} parent=11 // pred_check
          %p194 = pneg %p145
        $region22: #{tpu_custom_call.1} parent=11 // pred_check_branch
          %196 = sbr.rel (%p194) target = $region24
        $region23: #{tpu_custom_call.1} parent=11 // pred_region
          _
        $region24: #{tpu_custom_call.1} parent=11 // pred_fallthru
          _
      $region12: #{tpu_custom_call.1} parent=5 // pred_fallthru
        _
      %p197 = scmp.lt.s32.totalorder %s14, 2
      // Predicated region
      $region25: #{tpu_custom_call.1} parent=5 // pred_check
        %p198 = pneg %p197
      $region26: #{tpu_custom_call.1} parent=5 // pred_check_branch
        %200 = sbr.rel (%p198) target = $region28
      $region27: #{tpu_custom_call.1} parent=5 // pred_region
        // Predicated region
        $region29: #{tpu_custom_call.1} parent=27 // pred_check
          %p201 = pneg %p48
        $region30: #{tpu_custom_call.1} parent=27 // pred_check_branch
          %203 = sbr.rel (%p201) target = $region32
        $region31: #{tpu_custom_call.1} parent=27 // pred_region
          %p204 = scmp.lt.s32.totalorder %s21, 1
          %s205 = scalar_select %p204, %s21, 1
          %p206 = scmp.lt.s32.totalorder %s22, 1
          %s207 = scalar_select %p206, %s22, 1
          %s208 = smul.addr %s205, 2
          %s209 = sadd.s32 %s207, %s208
          %s210 = smul.addr %s209, 8
          %s211 = scalar_lea.vmem %s0, %s210
        $region32: #{tpu_custom_call.1} parent=27 // pred_fallthru
          _
        // Predicated region
        $region33: #{tpu_custom_call.1} parent=27 // pred_check
          %p212 = pneg %p76
        $region34: #{tpu_custom_call.1} parent=27 // pred_check_branch
          %214 = sbr.rel (%p212) target = $region36
        $region35: #{tpu_custom_call.1} parent=27 // pred_region
          %p215 = scmp.lt.s32.totalorder %s21, 1
          %s216 = scalar_select %p215, %s21, 1
          %p217 = scmp.lt.s32.totalorder %s22, 0
          %s218 = scalar_select %p217, %s22, 0
          %s219 = sadd.s32 %s218, %s216
          %s220 = smul.addr %s219, 8
          %s221 = scalar_lea.vmem %s1, %s220
        $region36: #{tpu_custom_call.1} parent=27 // pred_fallthru
          _
      $region28: #{tpu_custom_call.1} parent=5 // pred_fallthru
        _
      %p222 = scmp.le.s32.totalorder 1, %s14
      %p223 = scmp.lt.s32.totalorder %s14, 3
      %p224 = pnand %p222, %p223
      %p225 = pneg %p224
      // Predicated region
      $region37: #{tpu_custom_call.1} parent=5 // pred_check
        _
      $region38: #{tpu_custom_call.1} parent=5 // pred_check_branch
        %227 = sbr.rel (%p224) target = $region40
      $region39: #{tpu_custom_call.1} parent=5 // pred_region
        %s228 = ssub.s32 %s14, 1
        %p229 = scmp.lt.s32.totalorder %s23, 1
        %s230 = scalar_select %p229, %s23, 1
        %p231 = scmp.lt.s32.totalorder %s24, 1
        %s232 = scalar_select %p231, %s24, 1
        %s233 = smul.addr %s230, 2
        %s234 = sadd.s32 %s232, %s233
        %s235 = smul.addr %s234, 8
        %s236 = scalar_lea.vmem %s0, %s235
        %p237 = pneg %p54
        %p238 = pneg %p51
        %p239 = scmp.lt.s32.totalorder %s23, 1
        %s240 = scalar_select %p239, %s23, 1
        %p241 = scmp.lt.s32.totalorder %s24, 0
        %s242 = scalar_select %p241, %s24, 0
        %s243 = sadd.s32 %s242, %s240
        %s244 = smul.addr %s243, 8
        %s245 = scalar_lea.vmem %s1, %s244
        %p246 = pneg %p82
        %p247 = pneg %p79
        %p248 = pneg %p103
        %p249 = pneg %p100
        %p250 = pneg %p124
        %p251 = pneg %p121
        %p252 = pneg %p145
        %p253 = pneg %p142
        %p254 = pneg %p173
        %p255 = pneg %p170
        %s256 = sand.u32 %s160, 1
        %s257 = scalar_lea.sflag [#allocation3], %s256
        %s258 = sand.u32 %s160, 1
        %s259 = smul.addr %s258, 32
        %s260 = scalar_lea.vmem [#allocation2], %s259
        %p261 = scmp.lt.s32.totalorder %s23, 1
        %s262 = scalar_select %p261, %s23, 1
        %p263 = scmp.lt.s32.totalorder %s24, 1
        %s264 = scalar_select %p263, %s24, 1
        %s265 = smul.addr %s262, 2
        %s266 = sadd.s32 %s264, %s265
        %s267 = smul.addr %s266, 8
        %s268 = scalar_lea.vmem %s0, %s267
        %p269 = scmp.lt.s32.totalorder %s23, 1
        %s270 = scalar_select %p269, %s23, 1
        %p271 = scmp.lt.s32.totalorder %s24, 0
        %s272 = scalar_select %p271, %s24, 0
        %s273 = sadd.s32 %s272, %s270
        %s274 = smul.addr %s273, 8
        %s275 = scalar_lea.vmem %s1, %s274
        %v276 = vld [vmem:[%s268] sm:$0xff]
        %v277 = vld [vmem:[%s275] sm:$0xff]
        %280 = vrot.lane.b32.xlu0 %v276, 127
        %v281 = vpop.permute.xlu0 %280
        %282 = vrot.lane.b32.xlu0 %v277, 127
        %v283 = vpop.permute.xlu0 %282
        %vm284 = vcmask 1039360
        %v285 = vsel %vm284, %v281, %v283
        %v287 = vld [vmem:[%s2] sm:$0xff]
        %v288 = vld [vmem:[%s2 + $0x8] sm:$0xff]
        %v289 = vld [vmem:[%s2 + $0x10] sm:$0xff]
        %v290 = vld [vmem:[%s2 + $0x18] sm:$0xff]
        %v291 = vld [vmem:[%s2 + $0x20] sm:$0xff]
        %v292 = vld [vmem:[%s2 + $0x28] sm:$0xff]
        %v293 = vld [vmem:[%s2 + $0x30] sm:$0xff]
        %v294 = vld [vmem:[%s2 + $0x38] sm:$0xff]
        %vm295 = vcmask 130048
        %v297 = vsel %vm295, %v287, 0
        %v300 = vsel %vm295, %v288, 0
        %v303 = vsel %vm295, %v289, 0
        %v306 = vsel %vm295, %v290, 0
        %v309 = vsel %vm295, %v291, 0
        %v312 = vsel %vm295, %v292, 0
        %v315 = vsel %vm295, %v293, 0
        %v318 = vsel %vm295, %v294, 0
        %320 = vmatpush.msra.mxu0 0.0
        %321 = vmatpush.msra.mxu0 0.0
        %322 = vmatpush.msra.mxu0 0.0
        %323 = vmatpush.msra.mxu0 0.0
        %324 = vmatpush.msra.mxu0 0.0
        %325 = vmatpush.msra.mxu0 0.0
        %326 = vmatpush.msra.mxu0 0.0
        %327 = vmatpush.msra.mxu0 0.0
        %328 = vmatpush.msra.mxu0 0.0
        %329 = vmatpush.msra.mxu0 0.0
        %330 = vmatpush.msra.mxu0 0.0
        %331 = vmatpush.msra.mxu0 0.0
        %332 = vmatpush.msra.mxu0 0.0
        %333 = vmatpush.msra.mxu0 0.0
        %334 = vmatpush.msra.mxu0 %v285
        %335 = vmatpush.msra.mxu0 %v276
        %336 = vmatmul.f32.gmra.mxu0 %v297
        %v337 = vpop.f32.mrf.mxu0
        %v338 = vadd.f32 0.0, %v337
        %339 = vmatmul.f32.gmra.mxu0 %v300
        %v340 = vpop.f32.mrf.mxu0
        %v341 = vadd.f32 0.0, %v340
        %342 = vmatmul.f32.gmra.mxu0 %v303
        %v343 = vpop.f32.mrf.mxu0
        %v344 = vadd.f32 0.0, %v343
        %345 = vmatmul.f32.gmra.mxu0 %v306
        %v346 = vpop.f32.mrf.mxu0
        %v347 = vadd.f32 0.0, %v346
        %348 = vmatmul.f32.gmra.mxu0 %v309
        %v349 = vpop.f32.mrf.mxu0
        %v350 = vadd.f32 0.0, %v349
        %351 = vmatmul.f32.gmra.mxu0 %v312
        %v352 = vpop.f32.mrf.mxu0
        %v353 = vadd.f32 0.0, %v352
        %354 = vmatmul.f32.gmra.mxu0 %v315
        %v355 = vpop.f32.mrf.mxu0
        %v356 = vadd.f32 0.0, %v355
        %357 = vmatmul.f32.gmra.mxu0 %v318
        %v358 = vpop.f32.mrf.mxu0
        %v359 = vadd.f32 0.0, %v358
        %360 = vdwg.mxu0
        %v361 = vld [vmem:[%s3] sm:$0xff]
        %v362 = vld [vmem:[%s3 + $0x8] sm:$0xff]
        %v363 = vld [vmem:[%s3 + $0x10] sm:$0xff]
        %v364 = vld [vmem:[%s3 + $0x18] sm:$0xff]
        %v365 = vld [vmem:[%s4] sm:$0xff]
        %v366 = vld [vmem:[%s4 + $0x8] sm:$0xff]
        %v367 = vld [vmem:[%s4 + $0x10] sm:$0xff]
        %v368 = vld [vmem:[%s4 + $0x18] sm:$0xff]
        %v369 = vadd.f32 %v338, %v341
        %v370 = vadd.f32 %v369, %v344
        %v371 = vadd.f32 %v370, %v347
        %v372 = vrot.slane %v371, 4
        %v373 = vadd.f32 %v371, %v372
        %v374 = vrot.slane %v373, 2
        %v375 = vadd.f32 %v373, %v374
        %v376 = vrot.slane %v375, 1
        %v377 = vadd.f32 %v375, %v376
        %v378 = vmul.f32 %v377, 0.03125
        %v379 = vmul.f32 %v338, %v338
        %v380 = vmul.f32 %v341, %v341
        %v381 = vmul.f32 %v344, %v344
        %v382 = vmul.f32 %v347, %v347
        %v383 = vadd.f32 %v379, %v380
        %v384 = vadd.f32 %v383, %v381
        %v385 = vadd.f32 %v384, %v382
        %v386 = vrot.slane %v385, 4
        %v387 = vadd.f32 %v385, %v386
        %v388 = vrot.slane %v387, 2
        %v389 = vadd.f32 %v387, %v388
        %v390 = vrot.slane %v389, 1
        %v391 = vadd.f32 %v389, %v390
        %v392 = vmul.f32 %v391, 0.03125
        %v393 = vmul.f32 %v378, %v378
        %v394 = vsub.f32 %v392, %v393
        %v395 = vmax.f32 %v394, 0.0
        %v396 = vsub.f32 %v338, %v378
        %v397 = vsub.f32 %v341, %v378
        %v398 = vsub.f32 %v344, %v378
        %v399 = vsub.f32 %v347, %v378
        %v400 = vadd.f32 %v395, 1e-05
        %v401 = vrsqrt.pop %v400
        %v402 = vmul.f32 %v401, %v400
        %v403 = vmul.f32 %v402, %v401
        %v404 = vmul.f32 0.5, %v403
        %v405 = vsub.f32 1.5, %v404
        %v406 = vmul.f32 %v401, %v405
        %vm407 = vweird.f32 %v400
        %vm408 = vweird.f32 %v401
        %vm409 = vmor %vm407, %vm408
        %v410 = vsel %vm409, %v401, %v406
        %v411 = vmul.f32 %v396, %v410
        %v412 = vmul.f32 %v397, %v410
        %v413 = vmul.f32 %v398, %v410
        %v414 = vmul.f32 %v399, %v410
        %416 = vset.pattern.permute.xlu0 0
        %417 = vperm.xlu0 %416, %v361
        %v418 = vpop.permute.xlu0 %417
        %421 = vset.pattern.permute.xlu0 0
        %422 = vperm.xlu0 %421, %v362
        %v423 = vpop.permute.xlu0 %422
        %426 = vset.pattern.permute.xlu0 0
        %427 = vperm.xlu0 %426, %v363
        %v428 = vpop.permute.xlu0 %427
        %431 = vset.pattern.permute.xlu0 0
        %432 = vperm.xlu0 %431, %v364
        %v433 = vpop.permute.xlu0 %432
        %v435 = vmul.f32 %v411, %v418
        %v436 = vmul.f32 %v412, %v423
        %v437 = vmul.f32 %v413, %v428
        %v438 = vmul.f32 %v414, %v433
        %440 = vset.pattern.permute.xlu0 0
        %441 = vperm.xlu0 %440, %v365
        %v442 = vpop.permute.xlu0 %441
        %445 = vset.pattern.permute.xlu0 0
        %446 = vperm.xlu0 %445, %v366
        %v447 = vpop.permute.xlu0 %446
        %450 = vset.pattern.permute.xlu0 0
        %451 = vperm.xlu0 %450, %v367
        %v452 = vpop.permute.xlu0 %451
        %455 = vset.pattern.permute.xlu0 0
        %456 = vperm.xlu0 %455, %v368
        %v457 = vpop.permute.xlu0 %456
        %v459 = vadd.f32 %v435, %v442
        %v460 = vadd.f32 %v436, %v447
        %v461 = vadd.f32 %v437, %v452
        %v462 = vadd.f32 %v438, %v457
        %v463 = vmul.f32 %v459, 0.5
        %v464 = vmul.f32 %v460, 0.5
        %v465 = vmul.f32 %v461, 0.5
        %v466 = vmul.f32 %v462, 0.5
        %v467 = vmul.f32 %v459, 0.70710677
        %v468 = vmul.f32 %v460, 0.70710677
        %v469 = vmul.f32 %v461, 0.70710677
        %v470 = vmul.f32 %v462, 0.70710677
        %v471 = vmul.f32 %v467, %v467
        %v472 = vmin.f32 16.0, %v471
        %v473 = vmul.f32 %v472, 2.1237322e-06
        %v474 = vadd.f32 %v473, 0.00028619796
        %v475 = vmul.f32 %v472, %v474
        %v476 = vadd.f32 %v475, 0.0036580483
        %v477 = vmul.f32 %v472, %v476
        %v478 = vadd.f32 %v477, 0.05243302
        %v479 = vmul.f32 %v472, %v478
        %v480 = vadd.f32 %v479, 0.18741608
        %v481 = vmul.f32 %v472, %v480
        %v482 = vadd.f32 %v481, 1.1283791
        %v483 = vmul.f32 %v467, %v482
        %v484 = vmul.f32 %v472, 3.8918573e-05
        %v485 = vadd.f32 %v484, 0.001143296
        %v486 = vmul.f32 %v472, %v485
        %v487 = vadd.f32 %v486, 0.014752088
        %v488 = vmul.f32 %v472, %v487
        %v489 = vadd.f32 %v488, 0.112945676
        %v490 = vmul.f32 %v472, %v489
        %v491 = vadd.f32 %v490, 0.4994258
        %v492 = vmul.f32 %v472, %v491
        %v493 = vadd.f32 %v492, 1.0
        %v494 = vrcp.pop %v493
        %v495 = vmul.f32 %v493, %v494
        %v496 = vsub.f32 1.0, %v495
        %v497 = vmul.f32 %v494, %v496
        %v498 = vadd.f32 %v494, %v497
        %vm499 = vweird.f32 %v493
        %vm500 = vweird.f32 %v494
        %vm501 = vmor %vm499, %vm500
        %v502 = vsel %vm501, %v494, %v498
        %v503 = vand.u32 2147483647, %v493
        %vm504 = vcmp.eq.f32.partialorder %v503, 8.507059e+37
        %v505 = vand.u32 %v493, 2147483648
        %v506 = vor.u32 1.1754944e-38, %v505
        %v507 = vsel %vm504, %v506, %v502
        %v508 = vmul.f32 %v483, %v507
        %v509 = vmin.f32 %v508, 1.0
        %v510 = vmax.f32 %v509, -1.0
        %v511 = vmul.f32 %v468, %v468
        %v512 = vmin.f32 16.0, %v511
        %v513 = vmul.f32 %v512, 2.1237322e-06
        %v514 = vadd.f32 %v513, 0.00028619796
        %v515 = vmul.f32 %v512, %v514
        %v516 = vadd.f32 %v515, 0.0036580483
        %v517 = vmul.f32 %v512, %v516
        %v518 = vadd.f32 %v517, 0.05243302
        %v519 = vmul.f32 %v512, %v518
        %v520 = vadd.f32 %v519, 0.18741608
        %v521 = vmul.f32 %v512, %v520
        %v522 = vadd.f32 %v521, 1.1283791
        %v523 = vmul.f32 %v468, %v522
        %v524 = vmul.f32 %v512, 3.8918573e-05
        %v525 = vadd.f32 %v524, 0.001143296
        %v526 = vmul.f32 %v512, %v525
        %v527 = vadd.f32 %v526, 0.014752088
        %v528 = vmul.f32 %v512, %v527
        %v529 = vadd.f32 %v528, 0.112945676
        %v530 = vmul.f32 %v512, %v529
        %v531 = vadd.f32 %v530, 0.4994258
        %v532 = vmul.f32 %v512, %v531
        %v533 = vadd.f32 %v532, 1.0
        %v534 = vrcp.pop %v533
        %v535 = vmul.f32 %v533, %v534
        %v536 = vsub.f32 1.0, %v535
        %v537 = vmul.f32 %v534, %v536
        %v538 = vadd.f32 %v534, %v537
        %vm539 = vweird.f32 %v533
        %vm540 = vweird.f32 %v534
        %vm541 = vmor %vm539, %vm540
        %v542 = vsel %vm541, %v534, %v538
        %v543 = vand.u32 2147483647, %v533
        %vm544 = vcmp.eq.f32.partialorder %v543, 8.507059e+37
        %v545 = vand.u32 %v533, 2147483648
        %v546 = vor.u32 1.1754944e-38, %v545
        %v547 = vsel %vm544, %v546, %v542
        %v548 = vmul.f32 %v523, %v547
        %v549 = vmin.f32 %v548, 1.0
        %v550 = vmax.f32 %v549, -1.0
        %v551 = vmul.f32 %v469, %v469
        %v552 = vmin.f32 16.0, %v551
        %v553 = vmul.f32 %v552, 2.1237322e-06
        %v554 = vadd.f32 %v553, 0.00028619796
        %v555 = vmul.f32 %v552, %v554
        %v556 = vadd.f32 %v555, 0.0036580483
        %v557 = vmul.f32 %v552, %v556
        %v558 = vadd.f32 %v557, 0.05243302
        %v559 = vmul.f32 %v552, %v558
        %v560 = vadd.f32 %v559, 0.18741608
        %v561 = vmul.f32 %v552, %v560
        %v562 = vadd.f32 %v561, 1.1283791
        %v563 = vmul.f32 %v469, %v562
        %v564 = vmul.f32 %v552, 3.8918573e-05
        %v565 = vadd.f32 %v564, 0.001143296
        %v566 = vmul.f32 %v552, %v565
        %v567 = vadd.f32 %v566, 0.014752088
        %v568 = vmul.f32 %v552, %v567
        %v569 = vadd.f32 %v568, 0.112945676
        %v570 = vmul.f32 %v552, %v569
        %v571 = vadd.f32 %v570, 0.4994258
        %v572 = vmul.f32 %v552, %v571
        %v573 = vadd.f32 %v572, 1.0
        %v574 = vrcp.pop %v573
        %v575 = vmul.f32 %v573, %v574
        %v576 = vsub.f32 1.0, %v575
        %v577 = vmul.f32 %v574, %v576
        %v578 = vadd.f32 %v574, %v577
        %vm579 = vweird.f32 %v573
        %vm580 = vweird.f32 %v574
        %vm581 = vmor %vm579, %vm580
        %v582 = vsel %vm581, %v574, %v578
        %v583 = vand.u32 2147483647, %v573
        %vm584 = vcmp.eq.f32.partialorder %v583, 8.507059e+37
        %v585 = vand.u32 %v573, 2147483648
        %v586 = vor.u32 1.1754944e-38, %v585
        %v587 = vsel %vm584, %v586, %v582
        %v588 = vmul.f32 %v563, %v587
        %v589 = vmin.f32 %v588, 1.0
        %v590 = vmax.f32 %v589, -1.0
        %v591 = vmul.f32 %v470, %v470
        %v592 = vmin.f32 16.0, %v591
        %v593 = vmul.f32 %v592, 2.1237322e-06
        %v594 = vadd.f32 %v593, 0.00028619796
        %v595 = vmul.f32 %v592, %v594
        %v596 = vadd.f32 %v595, 0.0036580483
        %v597 = vmul.f32 %v592, %v596
        %v598 = vadd.f32 %v597, 0.05243302
        %v599 = vmul.f32 %v592, %v598
        %v600 = vadd.f32 %v599, 0.18741608
        %v601 = vmul.f32 %v592, %v600
        %v602 = vadd.f32 %v601, 1.1283791
        %v603 = vmul.f32 %v470, %v602
        %v604 = vmul.f32 %v592, 3.8918573e-05
        %v605 = vadd.f32 %v604, 0.001143296
        %v606 = vmul.f32 %v592, %v605
        %v607 = vadd.f32 %v606, 0.014752088
        %v608 = vmul.f32 %v592, %v607
        %v609 = vadd.f32 %v608, 0.112945676
        %v610 = vmul.f32 %v592, %v609
        %v611 = vadd.f32 %v610, 0.4994258
        %v612 = vmul.f32 %v592, %v611
        %v613 = vadd.f32 %v612, 1.0
        %v614 = vrcp.pop %v613
        %v615 = vmul.f32 %v613, %v614
        %v616 = vsub.f32 1.0, %v615
        %v617 = vmul.f32 %v614, %v616
        %v618 = vadd.f32 %v614, %v617
        %vm619 = vweird.f32 %v613
        %vm620 = vweird.f32 %v614
        %vm621 = vmor %vm619, %vm620
        %v622 = vsel %vm621, %v614, %v618
        %v623 = vand.u32 2147483647, %v613
        %vm624 = vcmp.eq.f32.partialorder %v623, 8.507059e+37
        %v625 = vand.u32 %v613, 2147483648
        %v626 = vor.u32 1.1754944e-38, %v625
        %v627 = vsel %vm624, %v626, %v622
        %v628 = vmul.f32 %v603, %v627
        %v629 = vmin.f32 %v628, 1.0
        %v630 = vmax.f32 %v629, -1.0
        %v631 = vadd.f32 %v510, 1.0
        %v632 = vadd.f32 %v550, 1.0
        %v633 = vadd.f32 %v590, 1.0
        %v634 = vadd.f32 %v630, 1.0
        %v635 = vmul.f32 %v463, %v631
        %v636 = vmul.f32 %v464, %v632
        %v637 = vmul.f32 %v465, %v633
        %v638 = vmul.f32 %v466, %v634
        %v639 = vadd.f32 %v350, %v353
        %v640 = vadd.f32 %v639, %v356
        %v641 = vadd.f32 %v640, %v359
        %v642 = vrot.slane %v641, 4
        %v643 = vadd.f32 %v641, %v642
        %v644 = vrot.slane %v643, 2
        %v645 = vadd.f32 %v643, %v644
        %v646 = vrot.slane %v645, 1
        %v647 = vadd.f32 %v645, %v646
        %v648 = vmul.f32 %v647, 0.03125
        %v649 = vmul.f32 %v350, %v350
        %v650 = vmul.f32 %v353, %v353
        %v651 = vmul.f32 %v356, %v356
        %v652 = vmul.f32 %v359, %v359
        %v653 = vadd.f32 %v649, %v650
        %v654 = vadd.f32 %v653, %v651
        %v655 = vadd.f32 %v654, %v652
        %v656 = vrot.slane %v655, 4
        %v657 = vadd.f32 %v655, %v656
        %v658 = vrot.slane %v657, 2
        %v659 = vadd.f32 %v657, %v658
        %v660 = vrot.slane %v659, 1
        %v661 = vadd.f32 %v659, %v660
        %v662 = vmul.f32 %v661, 0.03125
        %v663 = vmul.f32 %v648, %v648
        %v664 = vsub.f32 %v662, %v663
        %v665 = vmax.f32 %v664, 0.0
        %v666 = vsub.f32 %v350, %v648
        %v667 = vsub.f32 %v353, %v648
        %v668 = vsub.f32 %v356, %v648
        %v669 = vsub.f32 %v359, %v648
        %v670 = vadd.f32 %v665, 1e-05
        %v671 = vrsqrt.pop %v670
        %v672 = vmul.f32 %v671, %v670
        %v673 = vmul.f32 %v672, %v671
        %v674 = vmul.f32 0.5, %v673
        %v675 = vsub.f32 1.5, %v674
        %v676 = vmul.f32 %v671, %v675
        %vm677 = vweird.f32 %v670
        %vm678 = vweird.f32 %v671
        %vm679 = vmor %vm677, %vm678
        %v680 = vsel %vm679, %v671, %v676
        %v681 = vmul.f32 %v666, %v680
        %v682 = vmul.f32 %v667, %v680
        %v683 = vmul.f32 %v668, %v680
        %v684 = vmul.f32 %v669, %v680
        %v685 = vmul.f32 %v681, %v418
        %v686 = vmul.f32 %v682, %v423
        %v687 = vmul.f32 %v683, %v428
        %v688 = vmul.f32 %v684, %v433
        %v689 = vadd.f32 %v685, %v442
        %v690 = vadd.f32 %v686, %v447
        %v691 = vadd.f32 %v687, %v452
        %v692 = vadd.f32 %v688, %v457
        %v693 = vmul.f32 %v689, 0.5
        %v694 = vmul.f32 %v690, 0.5
        %v695 = vmul.f32 %v691, 0.5
        %v696 = vmul.f32 %v692, 0.5
        %v697 = vmul.f32 %v689, 0.70710677
        %v698 = vmul.f32 %v690, 0.70710677
        %v699 = vmul.f32 %v691, 0.70710677
        %v700 = vmul.f32 %v692, 0.70710677
        %v701 = vmul.f32 %v697, %v697
        %v702 = vmin.f32 16.0, %v701
        %v703 = vmul.f32 %v702, 2.1237322e-06
        %v704 = vadd.f32 %v703, 0.00028619796
        %v705 = vmul.f32 %v702, %v704
        %v706 = vadd.f32 %v705, 0.0036580483
        %v707 = vmul.f32 %v702, %v706
        %v708 = vadd.f32 %v707, 0.05243302
        %v709 = vmul.f32 %v702, %v708
        %v710 = vadd.f32 %v709, 0.18741608
        %v711 = vmul.f32 %v702, %v710
        %v712 = vadd.f32 %v711, 1.1283791
        %v713 = vmul.f32 %v697, %v712
        %v714 = vmul.f32 %v702, 3.8918573e-05
        %v715 = vadd.f32 %v714, 0.001143296
        %v716 = vmul.f32 %v702, %v715
        %v717 = vadd.f32 %v716, 0.014752088
        %v718 = vmul.f32 %v702, %v717
        %v719 = vadd.f32 %v718, 0.112945676
        %v720 = vmul.f32 %v702, %v719
        %v721 = vadd.f32 %v720, 0.4994258
        %v722 = vmul.f32 %v702, %v721
        %v723 = vadd.f32 %v722, 1.0
        %v724 = vrcp.pop %v723
        %v725 = vmul.f32 %v723, %v724
        %v726 = vsub.f32 1.0, %v725
        %v727 = vmul.f32 %v724, %v726
        %v728 = vadd.f32 %v724, %v727
        %vm729 = vweird.f32 %v723
        %vm730 = vweird.f32 %v724
        %vm731 = vmor %vm729, %vm730
        %v732 = vsel %vm731, %v724, %v728
        %v733 = vand.u32 2147483647, %v723
        %vm734 = vcmp.eq.f32.partialorder %v733, 8.507059e+37
        %v735 = vand.u32 %v723, 2147483648
        %v736 = vor.u32 1.1754944e-38, %v735
        %v737 = vsel %vm734, %v736, %v732
        %v738 = vmul.f32 %v713, %v737
        %v739 = vmin.f32 %v738, 1.0
        %v740 = vmax.f32 %v739, -1.0
        %v741 = vmul.f32 %v698, %v698
        %v742 = vmin.f32 16.0, %v741
        %v743 = vmul.f32 %v742, 2.1237322e-06
        %v744 = vadd.f32 %v743, 0.00028619796
        %v745 = vmul.f32 %v742, %v744
        %v746 = vadd.f32 %v745, 0.0036580483
        %v747 = vmul.f32 %v742, %v746
        %v748 = vadd.f32 %v747, 0.05243302
        %v749 = vmul.f32 %v742, %v748
        %v750 = vadd.f32 %v749, 0.18741608
        %v751 = vmul.f32 %v742, %v750
        %v752 = vadd.f32 %v751, 1.1283791
        %v753 = vmul.f32 %v698, %v752
        %v754 = vmul.f32 %v742, 3.8918573e-05
        %v755 = vadd.f32 %v754, 0.001143296
        %v756 = vmul.f32 %v742, %v755
        %v757 = vadd.f32 %v756, 0.014752088
        %v758 = vmul.f32 %v742, %v757
        %v759 = vadd.f32 %v758, 0.112945676
        %v760 = vmul.f32 %v742, %v759
        %v761 = vadd.f32 %v760, 0.4994258
        %v762 = vmul.f32 %v742, %v761
        %v763 = vadd.f32 %v762, 1.0
        %v764 = vrcp.pop %v763
        %v765 = vmul.f32 %v763, %v764
        %v766 = vsub.f32 1.0, %v765
        %v767 = vmul.f32 %v764, %v766
        %v768 = vadd.f32 %v764, %v767
        %vm769 = vweird.f32 %v763
        %vm770 = vweird.f32 %v764
        %vm771 = vmor %vm769, %vm770
        %v772 = vsel %vm771, %v764, %v768
        %v773 = vand.u32 2147483647, %v763
        %vm774 = vcmp.eq.f32.partialorder %v773, 8.507059e+37
        %v775 = vand.u32 %v763, 2147483648
        %v776 = vor.u32 1.1754944e-38, %v775
        %v777 = vsel %vm774, %v776, %v772
        %v778 = vmul.f32 %v753, %v777
        %v779 = vmin.f32 %v778, 1.0
        %v780 = vmax.f32 %v779, -1.0
        %v781 = vmul.f32 %v699, %v699
        %v782 = vmin.f32 16.0, %v781
        %v783 = vmul.f32 %v782, 2.1237322e-06
        %v784 = vadd.f32 %v783, 0.00028619796
        %v785 = vmul.f32 %v782, %v784
        %v786 = vadd.f32 %v785, 0.0036580483
        %v787 = vmul.f32 %v782, %v786
        %v788 = vadd.f32 %v787, 0.05243302
        %v789 = vmul.f32 %v782, %v788
        %v790 = vadd.f32 %v789, 0.18741608
        %v791 = vmul.f32 %v782, %v790
        %v792 = vadd.f32 %v791, 1.1283791
        %v793 = vmul.f32 %v699, %v792
        %v794 = vmul.f32 %v782, 3.8918573e-05
        %v795 = vadd.f32 %v794, 0.001143296
        %v796 = vmul.f32 %v782, %v795
        %v797 = vadd.f32 %v796, 0.014752088
        %v798 = vmul.f32 %v782, %v797
        %v799 = vadd.f32 %v798, 0.112945676
        %v800 = vmul.f32 %v782, %v799
        %v801 = vadd.f32 %v800, 0.4994258
        %v802 = vmul.f32 %v782, %v801
        %v803 = vadd.f32 %v802, 1.0
        %v804 = vrcp.pop %v803
        %v805 = vmul.f32 %v803, %v804
        %v806 = vsub.f32 1.0, %v805
        %v807 = vmul.f32 %v804, %v806
        %v808 = vadd.f32 %v804, %v807
        %vm809 = vweird.f32 %v803
        %vm810 = vweird.f32 %v804
        %vm811 = vmor %vm809, %vm810
        %v812 = vsel %vm811, %v804, %v808
        %v813 = vand.u32 2147483647, %v803
        %vm814 = vcmp.eq.f32.partialorder %v813, 8.507059e+37
        %v815 = vand.u32 %v803, 2147483648
        %v816 = vor.u32 1.1754944e-38, %v815
        %v817 = vsel %vm814, %v816, %v812
        %v818 = vmul.f32 %v793, %v817
        %v819 = vmin.f32 %v818, 1.0
        %v820 = vmax.f32 %v819, -1.0
        %v821 = vmul.f32 %v700, %v700
        %v822 = vmin.f32 16.0, %v821
        %v823 = vmul.f32 %v822, 2.1237322e-06
        %v824 = vadd.f32 %v823, 0.00028619796
        %v825 = vmul.f32 %v822, %v824
        %v826 = vadd.f32 %v825, 0.0036580483
        %v827 = vmul.f32 %v822, %v826
        %v828 = vadd.f32 %v827, 0.05243302
        %v829 = vmul.f32 %v822, %v828
        %v830 = vadd.f32 %v829, 0.18741608
        %v831 = vmul.f32 %v822, %v830
        %v832 = vadd.f32 %v831, 1.1283791
        %v833 = vmul.f32 %v700, %v832
        %v834 = vmul.f32 %v822, 3.8918573e-05
        %v835 = vadd.f32 %v834, 0.001143296
        %v836 = vmul.f32 %v822, %v835
        %v837 = vadd.f32 %v836, 0.014752088
        %v838 = vmul.f32 %v822, %v837
        %v839 = vadd.f32 %v838, 0.112945676
        %v840 = vmul.f32 %v822, %v839
        %v841 = vadd.f32 %v840, 0.4994258
        %v842 = vmul.f32 %v822, %v841
        %v843 = vadd.f32 %v842, 1.0
        %v844 = vrcp.pop %v843
        %v845 = vmul.f32 %v843, %v844
        %v846 = vsub.f32 1.0, %v845
        %v847 = vmul.f32 %v844, %v846
        %v848 = vadd.f32 %v844, %v847
        %vm849 = vweird.f32 %v843
        %vm850 = vweird.f32 %v844
        %vm851 = vmor %vm849, %vm850
        %v852 = vsel %vm851, %v844, %v848
        %v853 = vand.u32 2147483647, %v843
        %vm854 = vcmp.eq.f32.partialorder %v853, 8.507059e+37
        %v855 = vand.u32 %v843, 2147483648
        %v856 = vor.u32 1.1754944e-38, %v855
        %v857 = vsel %vm854, %v856, %v852
        %v858 = vmul.f32 %v833, %v857
        %v859 = vmin.f32 %v858, 1.0
        %v860 = vmax.f32 %v859, -1.0
        %v861 = vadd.f32 %v740, 1.0
        %v862 = vadd.f32 %v780, 1.0
        %v863 = vadd.f32 %v820, 1.0
        %v864 = vadd.f32 %v860, 1.0
        %v865 = vmul.f32 %v693, %v861
        %v866 = vmul.f32 %v694, %v862
        %v867 = vmul.f32 %v695, %v863
        %v868 = vmul.f32 %v696, %v864
        %v869 = vmax.f32 %v635, %v865
        %v870 = vmax.f32 %v636, %v866
        %v871 = vmax.f32 %v637, %v867
        %v872 = vmax.f32 %v638, %v868
        %873 = vst [vmem:[%s260] sm:$0xff] %v869
        %874 = vst [vmem:[%s260 + $0x8] sm:$0xff] %v870
        %875 = vst [vmem:[%s260 + $0x10] sm:$0xff] %v871
        %876 = vst [vmem:[%s260 + $0x18] sm:$0xff] %v872
        %s877 = sand.u32 %s160, 1
        %s878 = scalar_lea.sflag [#allocation3], %s877
        %s879 = sand.u32 %s160, 1
        %s880 = smul.addr %s879, 32
        %s881 = scalar_lea.vmem [#allocation2], %s880
        // Predicated region
        $region41: #{tpu_custom_call.1} parent=39 // pred_check
          %p882 = pneg %p170
        $region42: #{tpu_custom_call.1} parent=39 // pred_check_branch
          %884 = sbr.rel (%p882) target = $region44
        $region43: #{tpu_custom_call.1} parent=39 // pred_region
          %886 = vsyncadd %s878, 0
          %s887 = smul.addr %s23, 4
          %s888 = sadd.s32 %s24, %s887
          %s889 = smul.addr %s888, 8
          %s890 = scalar_lea.hbm %s5, %s889
          %s891 = sshll.u32 %s881, 4
          %s892 = int_to_ptr.vmem [resolvable:$true] %s891
          %s893 = sshll.u32 %s890, 4
          %s894 = int_to_ptr.hbm [resolvable:$true] %s893
          %899 = dma.vmem_to_hbm [thread:$0]  %s892, 512, %s894, %s878, 128, 128, 8
        $region44: #{tpu_custom_call.1} parent=39 // pred_fallthru
          _
      $region40: #{tpu_custom_call.1} parent=5 // pred_fallthru
        _
      %p900 = scmp.le.s32.totalorder 2, %s14
      // Predicated region
      $region45: #{tpu_custom_call.1} parent=5 // pred_check
        %p901 = pneg %p900
      $region46: #{tpu_custom_call.1} parent=5 // pred_check_branch
        %903 = sbr.rel (%p901) target = $region48
      $region47: #{tpu_custom_call.1} parent=5 // pred_region
        %s904 = ssub.s32 %s14, 2
        // Predicated region
        $region49: #{tpu_custom_call.1} parent=47 // pred_check
          %p905 = pneg %p176
        $region50: #{tpu_custom_call.1} parent=47 // pred_check_branch
          %907 = sbr.rel (%p905) target = $region52
        $region51: #{tpu_custom_call.1} parent=47 // pred_region
          %s908 = sand.u32 %s161, 1
          %s909 = scalar_lea.sflag [#allocation3], %s908
          %s910 = sand.u32 %s161, 1
          %s911 = smul.addr %s910, 32
          %s912 = scalar_lea.vmem [#allocation2], %s911
          %914 = dma.done %s909, 512
        $region52: #{tpu_custom_call.1} parent=47 // pred_fallthru
          _
      $region48: #{tpu_custom_call.1} parent=5 // pred_fallthru
        _
    $region6: #{tpu_custom_call.1} parent=1 // loop_footer
      %s18 = sadd.s32 1, %s14
    $region7: #{tpu_custom_call.1} parent=1 // loop_footer_branch
      %13 = sbr.rel target = $region3
    $region8: #{tpu_custom_call.1} parent=1 // loop_exit
      _
    %915 = vsyncpa [#allocation3], 1
    %s916 = scalar_lea.sflag [#allocation3], 1
    %917 = vsyncpa %s916, 1

</llo_original>
